<compile_context>
chip_gen: v7x
topology: tpu7x:2x2x1
jax: 0.10.0
libtpu: 0.0.40
codegen_flags: <defaults>
</compile_context>

<pallas_src>
import math

import jax
import jax.numpy as jnp
from jax.experimental import pallas as pl
from jax.experimental.pallas import tpu as pltpu


# ---------------------------------------------------------------------------
# Kernels: whole-array HBM -> HBM DMA copies (no grid, no VMEM staging)
# ---------------------------------------------------------------------------
def _dma_copy_kernel(x_hbm, o_hbm, sem):
    cp = pltpu.make_async_copy(x_hbm, o_hbm, sem)
    cp.start()
    cp.wait()


def _dma_copy2_kernel(u_hbm, l_hbm, ou_hbm, ol_hbm, sem):
    cu = pltpu.make_async_copy(u_hbm, ou_hbm, sem.at[0])
    cl = pltpu.make_async_copy(l_hbm, ol_hbm, sem.at[1])
    cu.start()
    cl.start()
    cu.wait()
    cl.wait()


# ---------------------------------------------------------------------------
# BoundFlatten.forward
# ---------------------------------------------------------------------------
def bound_flatten_forward(x, *, materialize=False):
    """x.view(B, -1).

    Default: metadata-only reshape (the true cost of a flatten is zero).
    materialize=True: single HBM->HBM DMA into a genuinely fresh (B, D) buffer.
    """
    B = x.shape[0]
    D = math.prod(x.shape[1:])
    x_flat = jnp.reshape(x, (B, D))  # torch .view(B, -1) on contiguous NCHW

    if not materialize:
        return x_flat

    return pl.pallas_call(
        _dma_copy_kernel,
        out_shape=jax.ShapeDtypeStruct((B, D), x.dtype),
        in_specs=[pl.BlockSpec(memory_space=pl.ANY)],
        out_specs=pl.BlockSpec(memory_space=pl.ANY),
        scratch_shapes=[pltpu.SemaphoreType.DMA(())],
    )(x_flat)


# ---------------------------------------------------------------------------
# BoundFlatten.interval_propagate (fused U/L copy when materializing)
# ---------------------------------------------------------------------------
def bound_flatten_interval_propagate(norm, h_U, h_L, eps, *, materialize=False):
    """Mirrors BoundFlatten.interval_propagate: flattens both bound tensors."""
    B = h_U.shape[0]
    D = math.prod(h_U.shape[1:])
    u_flat = jnp.reshape(h_U, (B, D))
    l_flat = jnp.reshape(h_L, (B, D))

    if not materialize:
        return (norm, u_flat, l_flat)

    out_u, out_l = pl.pallas_call(
        _dma_copy2_kernel,
        out_shape=(jax.ShapeDtypeStruct((B, D), h_U.dtype),
                   jax.ShapeDtypeStruct((B, D), h_L.dtype)),
        in_specs=[pl.BlockSpec(memory_space=pl.ANY),
                  pl.BlockSpec(memory_space=pl.ANY)],
        out_specs=(pl.BlockSpec(memory_space=pl.ANY),
                   pl.BlockSpec(memory_space=pl.ANY)),
        scratch_shapes=[pltpu.SemaphoreType.DMA((2,))],
    )(u_flat, l_flat)
    return (norm, out_u, out_l)


if __name__ == "__main__":
    key = jax.random.PRNGKey(0)
    # Small NCHW input consistent with a conv feature map: B=2, C=4, H=W=16.
    x = jax.random.normal(key, (2, 4, 16, 16), dtype=jnp.float32)
    ref = jnp.reshape(x, (x.shape[0], -1))

    # Default (recommended) path: metadata-only reshape, no kernel launch.
    y_view = bound_flatten_forward(x)
    y_view = jax.block_until_ready(y_view)
    assert y_view.shape == (2, 4 * 16 * 16), y_view.shape
    assert jnp.array_equal(y_view, ref), "flatten (view path) mismatch"

    # Materializing path: single whole-array HBM->HBM DMA.
    y_mat = bound_flatten_forward(x, materialize=True)
    y_mat = jax.block_until_ready(y_mat)
    assert y_mat.shape == (2, 1024), y_mat.shape
    assert jnp.array_equal(y_mat, ref), "flatten (pallas DMA path) mismatch"

    # interval_propagate: fused single-launch DMA copy of both bounds.
    kU, kL = jax.random.split(jax.random.PRNGKey(1))
    h_U = jax.random.normal(kU, (2, 4, 16, 16), dtype=jnp.float32)
    h_L = jax.random.normal(kL, (2, 4, 16, 16), dtype=jnp.float32)

    norm, uV, lV = bound_flatten_interval_propagate(jnp.inf, h_U, h_L, 0.1)
    assert uV.shape == (2, 1024) and lV.shape == (2, 1024)

    norm, uU, lL = bound_flatten_interval_propagate(
        jnp.inf, h_U, h_L, 0.1, materialize=True)
    uU, lL = jax.block_until_ready((uU, lL))
    assert uU.shape == (2, 1024) and lL.shape == (2, 1024)
    assert jnp.array_equal(uU, jnp.reshape(h_U, (2, -1)))
    assert jnp.array_equal(lL, jnp.reshape(h_L, (2, -1)))

    print("KERNEL_OK")
</pallas_src>

<mosaic_0001>
module attributes {stable_mosaic.version = 11 : i64} {
  func.func @_dma_copy_kernel(%arg0: memref<2x1024xf32, #tpu.memory_space<any>>, %arg1: memref<2x1024xf32, #tpu.memory_space<any>>, %arg2: memref<!tpu.dma_semaphore, #tpu.memory_space<semaphore_mem>>) attributes {dimension_semantics = [], scalar_prefetch = 0 : i64, scratch_operands = 1 : i64, tpu.core_type = #tpu.core_type<tc>} {
    tpu.enqueue_dma source(%arg0 : memref<2x1024xf32, #tpu.memory_space<any>>) target(%arg1 : memref<2x1024xf32, #tpu.memory_space<any>>) target_semaphore(%arg2 : memref<!tpu.dma_semaphore, #tpu.memory_space<semaphore_mem>>)
    tpu.wait_dma2 semaphore(%arg2 : memref<!tpu.dma_semaphore, #tpu.memory_space<semaphore_mem>>) src(%arg0 : memref<2x1024xf32, #tpu.memory_space<any>>) dst(%arg1 : memref<2x1024xf32, #tpu.memory_space<any>>)
    return
  }
}

</mosaic_0001>

<llo_original>
// kernel: tpu_custom_call.1
$region0: #{tpu_custom_call.1}
  #allocation0 [shape = 'u32[]', space=smem, size = 0x4, offset = 0x4, fixed_abs, tag = 'smem constant byte address 0x4 - core index']
  #allocation1 [shape = 'u32[144,128]{1,0:T(1,128)}', space=vmem, size = 0x12000, scoped, tag = 'internal scratch']
  #allocation2 [shape = 's32[1]{0}', space=sflag, size = 0x4, scoped, tag = 'scratch operand']
  #allocation3 [shape = 's32[]', space=sflag, size = 0x4, offset = 0, fixed_abs, tag = 'sflag constant byte address 0x0 - dummy sync flag']
  #allocation4 [shape = 'u32[0]{0}', space=smem, size = 0, offset = 0, fixed_abs, tag = 'smem constant byte address 0x0 - null']
  %s0 = inlined_call_operand.hbm [shape: f32[2,1024], index: 0, kind: input, shape index: {}]
  %s1 = inlined_call_operand.hbm [shape: f32[2,1024], index: 1, kind: output, shape index: {}]
  %s2 = sld [smem:[#allocation0]]
  $region2: #{tpu_custom_call.1} parent=0
    _
  %s4 = ssub.s32 1, %s2
  %s5 = scalar_select 0, %s4, %s2
  %s7 = sshll.u32 1, 14
  %s8 = sxor.u32 4294967295, %s7
  %s11 = sshll.u32 3, 24
  %s12 = sxor.u32 4294967295, %s11
  %s13 = sand.u32 0, %s12
  %s15 = sor.u32 %s13, 0
  %18 = dma.general %s0, 256, %s1, [#allocation2], [#allocation3], [#allocation4], %s15, 0
  %s19 = smul.u32 2, 1
  %s20 = smul.u32 %s19, 8
  %s21 = sshll.u32 %s20, 4
  %22 = dma.done [#allocation2], %s21
  %23 = vsyncmov [#allocation2]
  %s24 = vpop.sfrf %23
  %p25 = scmp.eq.s32.totalorder %s24, 0
  %p26 = pneg %p25
  %28 = shalt.err (%p26)

</llo_original>
